<compile_context>
chip_gen: v6e
topology: v6e:2x2x1
jax: 0.10.0
libtpu: 0.0.40
codegen_flags: <defaults>
</compile_context>

<pallas_src>
import functools

import jax
import jax.numpy as jnp
from jax.experimental import pallas as pl
from jax.experimental.pallas import tpu as pltpu

VOCAB = 3  # speaker ids: 0 (padding), 1, 2


def speaker_kernel(ids_ref, table_ref, o_ref, *, fold, embed_dim):
    # ids_ref:   (tile, fold)        int32 id tile (fold ids per output row)
    # table_ref: (VOCAB, embed_dim)  embedding table (resident across grid)
    # o_ref:     (tile, fold*embed_dim)
    ids = ids_ref[...]                      # (tile, fold)
    t0 = table_ref[0:1, :]                  # (1, D)  padding row
    t1 = table_ref[1:2, :]                  # (1, D)
    t2 = table_ref[2:3, :]                  # (1, D)

    parts = []
    for j in range(fold):                   # static unroll over the tiny fold
        idj = ids[:, j:j + 1]               # (tile, 1)
        # 2 compares + 2 selects per fold column (VPU); true gather semantics.
        parts.append(jnp.where(idj == 2, t2, jnp.where(idj == 1, t1, t0)))

    block = parts[0] if fold == 1 else jnp.concatenate(parts, axis=-1)
    o_ref[...] = block.astype(o_ref.dtype)  # single lane-dense store


def speaker_embed(speakers, table, *, block_bytes=2 * 1024 * 1024):
    """speakers: (B, S) int in {0,1,2} -> embeddings (B, S, D)."""
    B, S = speakers.shape
    V, D = table.shape
    N = B * S
    itemsize = jnp.dtype(table.dtype).itemsize

    # Fold r consecutive rows into one output row so the output block minor
    # dim is >= 128 lanes (lane-dense stores/DMA).  Falls back to r=1 when D
    # already spans >= 128 lanes or the fold does not divide N.
    r = 1
    if D < 128 and 128 % D == 0 and N % (128 // D) == 0:
        r = 128 // D
    Dr = r * D
    Nr = N // r

    ids = speakers.reshape(Nr, r).astype(jnp.int32)   # row-major compatible

    # D-aware row tile: ~block_bytes per output block, multiple of 8 rows,
    # or the whole problem in one step when it is small.
    rows = max(8, (block_bytes // (itemsize * Dr)) // 8 * 8)
    tile_r = Nr if rows >= Nr else rows
    grid = (pl.cdiv(Nr, tile_r),)           # partial last block -> masked writeback

    kernel = functools.partial(speaker_kernel, fold=r, embed_dim=D)

    out = pl.pallas_call(
        kernel,
        out_shape=jax.ShapeDtypeStruct((Nr, Dr), table.dtype),
        grid=grid,
        in_specs=[
            pl.BlockSpec((tile_r, r), lambda i: (i, 0)),   # id tile
            pl.BlockSpec((V, D), lambda i: (0, 0)),        # table (resident)
        ],
        out_specs=pl.BlockSpec((tile_r, Dr), lambda i: (i, 0)),
        compiler_params=pltpu.CompilerParams(
            dimension_semantics=("parallel",)),
    )(ids, table)

    # (Nr, r*D) is row-major identical to (N, D): free reshape, no slice.
    return out.reshape(B, S, D)


def init_table(key, embed_dim):
    """PyTorch nn.Embedding init: N(0,1) rows, padding_idx row zeroed."""
    w = jax.random.normal(key, (VOCAB, embed_dim), jnp.float32)
    return w.at[0].set(0.0)   # padding_idx=0


def speaker_ref(speakers, table):
    return jnp.take(table, speakers, axis=0)


if __name__ == "__main__":
    # Small shapes consistent with the module: batch=2, seq=8, speaker_dim=32.
    B, S, D = 2, 8, 32

    key = jax.random.PRNGKey(0)
    k_ids, k_tab = jax.random.split(key)
    speakers = jax.random.randint(k_ids, (B, S), 0, VOCAB, jnp.int32)
    table = init_table(k_tab, D)

    # TODO(synk): nn.Dropout is stochastic in train mode; implemented here as
    # identity (eval-mode semantics).
    out = speaker_embed(speakers, table)
    out = jax.block_until_ready(out)

    ref = speaker_ref(speakers, table)
    assert out.shape == (B, S, D)
    assert jnp.allclose(out, ref, atol=1e-6, rtol=1e-6)

    print("KERNEL_OK")
</pallas_src>

<mosaic_0001>
module attributes {stable_mosaic.version = 11 : i64} {
  func.func @speaker_kernel(%arg0: i32, %arg1: memref<4x4xi32, #tpu.memory_space<vmem>>, %arg2: memref<3x32xf32, #tpu.memory_space<vmem>>, %arg3: memref<4x128xf32, #tpu.memory_space<vmem>>) attributes {dimension_semantics = [#tpu.dimension_semantics<parallel>], iteration_bounds = array<i64: 1>, scalar_prefetch = 0 : i64, scratch_operands = 0 : i64, tpu.core_type = #tpu.core_type<tc>, window_params = [{transform_indices = @transform_0, window_bounds = array<i64: 4, 4>}, {pipeline_mode = #tpu.pipeline_mode<synchronous>, transform_indices = @transform_1, window_bounds = array<i64: 3, 32>}, {transform_indices = @transform_2, window_bounds = array<i64: 4, 128>}]} {
    %c0 = arith.constant 0 : index
    %c0_0 = arith.constant 0 : index
    %0 = vector.load %arg1[%c0, %c0_0] : memref<4x4xi32, #tpu.memory_space<vmem>>, vector<4x4xi32>
    %c0_1 = arith.constant 0 : index
    %c0_2 = arith.constant 0 : index
    %1 = vector.load %arg2[%c0_1, %c0_2] : memref<3x32xf32, #tpu.memory_space<vmem>>, vector<1x32xf32>
    %c1 = arith.constant 1 : index
    %c0_3 = arith.constant 0 : index
    %2 = vector.load %arg2[%c1, %c0_3] : memref<3x32xf32, #tpu.memory_space<vmem>>, vector<1x32xf32>
    %c2 = arith.constant 2 : index
    %c0_4 = arith.constant 0 : index
    %3 = vector.load %arg2[%c2, %c0_4] : memref<3x32xf32, #tpu.memory_space<vmem>>, vector<1x32xf32>
    %4 = vector.extract_strided_slice %0 {offsets = [0, 0], sizes = [4, 1], strides = [1, 1]} : vector<4x4xi32> to vector<4x1xi32>
    %c2_i32 = arith.constant 2 : i32
    %5 = vector.broadcast %c2_i32 : i32 to vector<4x1xi32>
    %6 = arith.cmpi eq, %4, %5 : vector<4x1xi32>
    %c1_i32 = arith.constant 1 : i32
    %7 = vector.broadcast %c1_i32 : i32 to vector<4x1xi32>
    %8 = arith.cmpi eq, %4, %7 : vector<4x1xi32>
    %9 = vector.shape_cast %8 : vector<4x1xi1> to vector<4x1xi1>
    %10 = vector.broadcast %9 : vector<4x1xi1> to vector<4x32xi1>
    %11 = vector.shape_cast %2 : vector<1x32xf32> to vector<1x32xf32>
    %12 = vector.broadcast %11 : vector<1x32xf32> to vector<4x32xf32>
    %13 = vector.shape_cast %1 : vector<1x32xf32> to vector<1x32xf32>
    %14 = vector.broadcast %13 : vector<1x32xf32> to vector<4x32xf32>
    %15 = arith.select %10, %12, %14 : vector<4x32xi1>, vector<4x32xf32>
    %16 = vector.shape_cast %6 : vector<4x1xi1> to vector<4x1xi1>
    %17 = vector.broadcast %16 : vector<4x1xi1> to vector<4x32xi1>
    %18 = vector.shape_cast %3 : vector<1x32xf32> to vector<1x32xf32>
    %19 = vector.broadcast %18 : vector<1x32xf32> to vector<4x32xf32>
    %20 = arith.select %17, %19, %15 : vector<4x32xi1>, vector<4x32xf32>
    %21 = vector.extract_strided_slice %0 {offsets = [0, 1], sizes = [4, 1], strides = [1, 1]} : vector<4x4xi32> to vector<4x1xi32>
    %c2_i32_5 = arith.constant 2 : i32
    %22 = vector.broadcast %c2_i32_5 : i32 to vector<4x1xi32>
    %23 = arith.cmpi eq, %21, %22 : vector<4x1xi32>
    %c1_i32_6 = arith.constant 1 : i32
    %24 = vector.broadcast %c1_i32_6 : i32 to vector<4x1xi32>
    %25 = arith.cmpi eq, %21, %24 : vector<4x1xi32>
    %26 = vector.shape_cast %25 : vector<4x1xi1> to vector<4x1xi1>
    %27 = vector.broadcast %26 : vector<4x1xi1> to vector<4x32xi1>
    %28 = vector.shape_cast %2 : vector<1x32xf32> to vector<1x32xf32>
    %29 = vector.broadcast %28 : vector<1x32xf32> to vector<4x32xf32>
    %30 = vector.shape_cast %1 : vector<1x32xf32> to vector<1x32xf32>
    %31 = vector.broadcast %30 : vector<1x32xf32> to vector<4x32xf32>
    %32 = arith.select %27, %29, %31 : vector<4x32xi1>, vector<4x32xf32>
    %33 = vector.shape_cast %23 : vector<4x1xi1> to vector<4x1xi1>
    %34 = vector.broadcast %33 : vector<4x1xi1> to vector<4x32xi1>
    %35 = vector.shape_cast %3 : vector<1x32xf32> to vector<1x32xf32>
    %36 = vector.broadcast %35 : vector<1x32xf32> to vector<4x32xf32>
    %37 = arith.select %34, %36, %32 : vector<4x32xi1>, vector<4x32xf32>
    %38 = vector.extract_strided_slice %0 {offsets = [0, 2], sizes = [4, 1], strides = [1, 1]} : vector<4x4xi32> to vector<4x1xi32>
    %c2_i32_7 = arith.constant 2 : i32
    %39 = vector.broadcast %c2_i32_7 : i32 to vector<4x1xi32>
    %40 = arith.cmpi eq, %38, %39 : vector<4x1xi32>
    %c1_i32_8 = arith.constant 1 : i32
    %41 = vector.broadcast %c1_i32_8 : i32 to vector<4x1xi32>
    %42 = arith.cmpi eq, %38, %41 : vector<4x1xi32>
    %43 = vector.shape_cast %42 : vector<4x1xi1> to vector<4x1xi1>
    %44 = vector.broadcast %43 : vector<4x1xi1> to vector<4x32xi1>
    %45 = vector.shape_cast %2 : vector<1x32xf32> to vector<1x32xf32>
    %46 = vector.broadcast %45 : vector<1x32xf32> to vector<4x32xf32>
    %47 = vector.shape_cast %1 : vector<1x32xf32> to vector<1x32xf32>
    %48 = vector.broadcast %47 : vector<1x32xf32> to vector<4x32xf32>
    %49 = arith.select %44, %46, %48 : vector<4x32xi1>, vector<4x32xf32>
    %50 = vector.shape_cast %40 : vector<4x1xi1> to vector<4x1xi1>
    %51 = vector.broadcast %50 : vector<4x1xi1> to vector<4x32xi1>
    %52 = vector.shape_cast %3 : vector<1x32xf32> to vector<1x32xf32>
    %53 = vector.broadcast %52 : vector<1x32xf32> to vector<4x32xf32>
    %54 = arith.select %51, %53, %49 : vector<4x32xi1>, vector<4x32xf32>
    %55 = vector.extract_strided_slice %0 {offsets = [0, 3], sizes = [4, 1], strides = [1, 1]} : vector<4x4xi32> to vector<4x1xi32>
    %c2_i32_9 = arith.constant 2 : i32
    %56 = vector.broadcast %c2_i32_9 : i32 to vector<4x1xi32>
    %57 = arith.cmpi eq, %55, %56 : vector<4x1xi32>
    %c1_i32_10 = arith.constant 1 : i32
    %58 = vector.broadcast %c1_i32_10 : i32 to vector<4x1xi32>
    %59 = arith.cmpi eq, %55, %58 : vector<4x1xi32>
    %60 = vector.shape_cast %59 : vector<4x1xi1> to vector<4x1xi1>
    %61 = vector.broadcast %60 : vector<4x1xi1> to vector<4x32xi1>
    %62 = vector.shape_cast %2 : vector<1x32xf32> to vector<1x32xf32>
    %63 = vector.broadcast %62 : vector<1x32xf32> to vector<4x32xf32>
    %64 = vector.shape_cast %1 : vector<1x32xf32> to vector<1x32xf32>
    %65 = vector.broadcast %64 : vector<1x32xf32> to vector<4x32xf32>
    %66 = arith.select %61, %63, %65 : vector<4x32xi1>, vector<4x32xf32>
    %67 = vector.shape_cast %57 : vector<4x1xi1> to vector<4x1xi1>
    %68 = vector.broadcast %67 : vector<4x1xi1> to vector<4x32xi1>
    %69 = vector.shape_cast %3 : vector<1x32xf32> to vector<1x32xf32>
    %70 = vector.broadcast %69 : vector<1x32xf32> to vector<4x32xf32>
    %71 = arith.select %68, %70, %66 : vector<4x32xi1>, vector<4x32xf32>
    %72 = tpu.concatenate %20, %37, %54, %71 in 1 : vector<4x32xf32>, vector<4x32xf32>, vector<4x32xf32>, vector<4x32xf32> -> vector<4x128xf32>
    %c0_11 = arith.constant 0 : index
    %c0_12 = arith.constant 0 : index
    %73 = vector.load %arg3[%c0_11, %c0_12] : memref<4x128xf32, #tpu.memory_space<vmem>>, vector<4x128xf32>
    tpu.vector_store %arg3[%c0_11, %c0_12], %72 {strides = array<i32>} : memref<4x128xf32, #tpu.memory_space<vmem>>, vector<4x128xf32>,
    return
  }
  func.func @transform_0(%arg0: i32) -> (i32, i32) {
    %c0_i32 = arith.constant 0 : i32
    %c0_i32_0 = arith.constant 0 : i32
    return %arg0, %c0_i32 : i32, i32
  }
  func.func @transform_1(%arg0: i32) -> (i32, i32) {
    %c0_i32 = arith.constant 0 : i32
    %c0_i32_0 = arith.constant 0 : i32
    %c0_i32_1 = arith.constant 0 : i32
    return %c0_i32, %c0_i32_0 : i32, i32
  }
  func.func @transform_2(%arg0: i32) -> (i32, i32) {
    %c0_i32 = arith.constant 0 : i32
    %c0_i32_0 = arith.constant 0 : i32
    return %arg0, %c0_i32 : i32, i32
  }
}

</mosaic_0001>

<llo_original>
// kernel: tpu_custom_call.1
$region0: #{tpu_custom_call.1}
  #allocation0 [shape = 'u32[]', space=smem, size = 0x4, offset = 0x4, fixed_abs, tag = 'smem constant byte address 0x4 - core index']
  #allocation1 [shape = 'u32[144,128]{1,0:T(1,128)}', space=vmem, size = 0x12000, scoped, tag = 'internal scratch']
  %s0 = inlined_call_operand.hbm [shape: s32[4,4], index: 0, kind: input, shape index: {}]
  %s1 = inlined_call_operand.hbm [shape: f32[3,32], index: 1, kind: input, shape index: {}]
  %s2 = inlined_call_operand.hbm [shape: f32[4,128], index: 2, kind: output, shape index: {}]
  %s3 = sld [smem:[#allocation0]]
  $region26: #{tpu_custom_call.1} parent=0
    _
  %s5 = ssub.s32 1, %s3
  %s6 = scalar_select 0, %s5, %s3
  $region1: #{tpu_custom_call.1} parent=0
    #allocation2 [shape = 'u8[2048]{0}', space=vmem, size = 0x800, scoped, tag = 'input window, operand 0, single buffered']
    #allocation3 [shape = 's32[1]{0}', space=sflag, size = 0x4, scoped, tag = 'scoped memory for tpu_custom_call.1']
    #allocation4 [shape = 's32[1]{0}', space=sflag, size = 0x4, scoped, tag = 'scoped memory for tpu_custom_call.1']
    #allocation5 [shape = 'u8[2048]{0}', space=vmem, size = 0x800, scoped, tag = 'input window, operand 1, single buffered']
    #allocation6 [shape = 's32[1]{0}', space=sflag, size = 0x4, scoped, tag = 'scoped memory for tpu_custom_call.1']
    #allocation7 [shape = 'u8[2048]{0}', space=vmem, size = 0x800, scoped, tag = 'output window, operand 0, single buffered']
    %7 = vsyncpa [#allocation3], 0
    %8 = vsyncpa [#allocation6], 0
    %9 = vsyncpa [#allocation4], 0
    // Predicated region
    $region2: #{tpu_custom_call.1} parent=1 // pred_check
      _
    $region3: #{tpu_custom_call.1} parent=1 // pred_check_branch
      %11 = sbr.rel (0) target = $region5
    $region4: #{tpu_custom_call.1} parent=1 // pred_region
      %s13 = ssub.s32 64, 64
      %14 = vsyncadd [#allocation3], %s13
      %s16 = sshll.u32 [#allocation2], 4
      %s17 = int_to_ptr.vmem [resolvable:$true] %s16
      %19 = dma.hbm_to_vmem [thread:$0]  %s0, 64, %s17, [#allocation3]
    $region5: #{tpu_custom_call.1} parent=1 // pred_fallthru
      _
    // Predicated region
    $region6: #{tpu_custom_call.1} parent=1 // pred_check
      _
    $region7: #{tpu_custom_call.1} parent=1 // pred_check_branch
      %21 = sbr.rel (0) target = $region9
    $region8: #{tpu_custom_call.1} parent=1 // pred_region
      %s23 = ssub.s32 64, 64
      %24 = vsyncadd [#allocation6], %s23
      %s26 = sshll.u32 [#allocation5], 4
      %s27 = int_to_ptr.vmem [resolvable:$true] %s26
      %29 = dma.hbm_to_vmem [thread:$0]  %s1, 64, %s27, [#allocation6]
    $region9: #{tpu_custom_call.1} parent=1 // pred_fallthru
      _
    // Predicated region
    $region10: #{tpu_custom_call.1} parent=1 // pred_check
      _
    $region11: #{tpu_custom_call.1} parent=1 // pred_check_branch
      %31 = sbr.rel (0) target = $region13
    $region12: #{tpu_custom_call.1} parent=1 // pred_region
      %32 = dma.done [#allocation3], 64
    $region13: #{tpu_custom_call.1} parent=1 // pred_fallthru
      _
    // Predicated region
    $region14: #{tpu_custom_call.1} parent=1 // pred_check
      _
    $region15: #{tpu_custom_call.1} parent=1 // pred_check_branch
      %34 = sbr.rel (0) target = $region17
    $region16: #{tpu_custom_call.1} parent=1 // pred_region
      %35 = dma.done [#allocation6], 64
    $region17: #{tpu_custom_call.1} parent=1 // pred_fallthru
      _
    %v36 = vld [vmem:[#allocation2] sm:$0xf]
    %v37 = vld [vmem:[#allocation5] sm:$0x1]
    %v38 = vld [vmem:[#allocation5 + $0x1] sm:$0x1]
    %v39 = vld [vmem:[#allocation5 + $0x2] sm:$0x1]
    %vm40 = vcmp.eq.s32.totalorder %v36, 2
    %vm41 = vcmp.eq.s32.totalorder %v36, 1
    %v42 = vsel %vm41, 1, 0
    %43 = vset.pattern.permute.xlu0 0
    %44 = vperm.xlu0 %43, %v42
    %v45 = vpop.permute.xlu0 %44
    %vm46 = vcmp.eq.s32.totalorder %v45, 1
    %v47 = vlaneseq
    %v48 = vshrl.u32 %v47, 7
    %v49 = vsub.s32 0, %v48
    %v50 = vrot.slane %v38, %v49
    %v51 = vlaneseq
    %v52 = vshrl.u32 %v51, 7
    %v53 = vsub.s32 0, %v52
    %v54 = vrot.slane %v37, %v53
    %v55 = vsel %vm46, %v50, %v54
    %v56 = vsel %vm40, 1, 0
    %57 = vset.pattern.permute.xlu0 0
    %58 = vperm.xlu0 %57, %v56
    %v59 = vpop.permute.xlu0 %58
    %vm60 = vcmp.eq.s32.totalorder %v59, 1
    %v61 = vlaneseq
    %v62 = vshrl.u32 %v61, 7
    %v63 = vsub.s32 0, %v62
    %v64 = vrot.slane %v39, %v63
    %v65 = vsel %vm60, %v64, %v55
    %66 = vset.pattern.permute.xlu0 1
    %67 = vperm.xlu0 %66, %v42
    %v68 = vpop.permute.xlu0 %67
    %vm69 = vcmp.eq.s32.totalorder %v68, 1
    %v70 = vsel %vm69, %v50, %v54
    %71 = vset.pattern.permute.xlu0 1
    %72 = vperm.xlu0 %71, %v56
    %v73 = vpop.permute.xlu0 %72
    %vm74 = vcmp.eq.s32.totalorder %v73, 1
    %v75 = vsel %vm74, %v64, %v70
    %76 = vset.pattern.permute.xlu0 2
    %77 = vperm.xlu0 %76, %v42
    %v78 = vpop.permute.xlu0 %77
    %vm79 = vcmp.eq.s32.totalorder %v78, 1
    %v80 = vsel %vm79, %v50, %v54
    %81 = vset.pattern.permute.xlu0 2
    %82 = vperm.xlu0 %81, %v56
    %v83 = vpop.permute.xlu0 %82
    %vm84 = vcmp.eq.s32.totalorder %v83, 1
    %v85 = vsel %vm84, %v64, %v80
    %86 = vset.pattern.permute.xlu0 3
    %87 = vperm.xlu0 %86, %v42
    %v88 = vpop.permute.xlu0 %87
    %vm89 = vcmp.eq.s32.totalorder %v88, 1
    %v90 = vsel %vm89, %v50, %v54
    %91 = vset.pattern.permute.xlu0 3
    %92 = vperm.xlu0 %91, %v56
    %v93 = vpop.permute.xlu0 %92
    %vm94 = vcmp.eq.s32.totalorder %v93, 1
    %v95 = vsel %vm94, %v64, %v90
    %97 = vrot.lane.b32.xlu0 %v75, 32
    %v98 = vpop.permute.xlu0 %97
    %101 = vrot.lane.b32.xlu0 %v85, 64
    %v102 = vpop.permute.xlu0 %101
    %105 = vrot.lane.b32.xlu0 %v95, 96
    %v106 = vpop.permute.xlu0 %105
    %vm108 = vcmask 261120
    %v109 = vsel %vm108, %v65, %v98
    %vm110 = vcmask 523264
    %v111 = vsel %vm110, %v109, %v102
    %vm112 = vcmask 785408
    %v113 = vsel %vm112, %v111, %v106
    %114 = vst [vmem:[#allocation7] sm:$0xf] %v113
    // Predicated region
    $region18: #{tpu_custom_call.1} parent=1 // pred_check
      _
    $region19: #{tpu_custom_call.1} parent=1 // pred_check_branch
      %116 = sbr.rel (0) target = $region21
    $region20: #{tpu_custom_call.1} parent=1 // pred_region
      %s118 = ssub.s32 64, 64
      %119 = vsyncadd [#allocation4], %s118
      %s121 = sshll.u32 [#allocation7], 4
      %s122 = int_to_ptr.vmem [resolvable:$true] %s121
      %124 = dma.vmem_to_hbm [thread:$0]  %s122, 64, %s2, [#allocation4]
    $region21: #{tpu_custom_call.1} parent=1 // pred_fallthru
      _
    // Predicated region
    $region22: #{tpu_custom_call.1} parent=1 // pred_check
      _
    $region23: #{tpu_custom_call.1} parent=1 // pred_check_branch
      %126 = sbr.rel (0) target = $region25
    $region24: #{tpu_custom_call.1} parent=1 // pred_region
      %127 = dma.done [#allocation4], 64
    $region25: #{tpu_custom_call.1} parent=1 // pred_fallthru
      _
    %128 = vsyncpa [#allocation3], 1
    %129 = vsyncpa [#allocation6], 1
    %130 = vsyncpa [#allocation4], 1

</llo_original>
